<compile_context>
chip_gen: v5e
topology: v5e:2x2
jax: 0.10.0
libtpu: 0.0.40
codegen_flags: <defaults>
</compile_context>

<pallas_src>
import jax
import jax.numpy as jnp
from jax.experimental import pallas as pl
from jax.experimental.pallas import tpu as pltpu

_LANES = 128
_SUBLANES = 8
_VMEM_BUDGET = 6 * 1024 * 1024  # target bytes per (double-buffered) input buffer


def _round_up(a, b):
    return ((a + b - 1) // b) * b


def _pick_tile(total_units, unit_bytes, cap=512):
    """Pick a row-tile size (in 'units') under the VMEM budget.

    Returns (tile, padded_total, grid).  tile is a multiple of 8 unless the
    whole extent fits in a single block (full-dim blocks are exempt from the
    sublane rule).  The grid extent is kept even so v7x can split it across
    both TensorCores.
    """
    by_budget = (_VMEM_BUDGET // max(unit_bytes, 1)) // _SUBLANES * _SUBLANES
    tile = max(_SUBLANES, min(cap, by_budget))
    tile = min(tile, _round_up(total_units, _SUBLANES))
    grid = -(-total_units // tile)
    if grid == 1:
        # Single full-extent block: no row padding beyond what the caller needs.
        return total_units, total_units, 1
    tile = _round_up(-(-total_units // grid), _SUBLANES)  # balance the last tile
    padded = _round_up(total_units, tile)
    grid = padded // tile
    if grid > 1 and grid % 2 == 1:  # v7x megacore: even split across the 2 TCs
        padded += tile
        grid += 1
    return tile, padded, grid


# ---------------------------------------------------------------------------
# Kernels
# ---------------------------------------------------------------------------

def _std_last_kernel_lane_dense(x_ref, o_ref):
    # x_ref: (TILE_B, 128, W) -- 128 independent rows per group, W on lanes.
    # o_ref: (TILE_B, 128)    -- per-row std, lane-dense stores.
    x = x_ref[...].astype(jnp.float32)
    n = x.shape[-1]
    mean = jnp.mean(x, axis=-1, keepdims=True)
    diff = x - mean
    # Unbiased (N-1) estimator, two-pass form for numerical safety.
    var = jnp.sum(diff * diff, axis=-1) / jnp.float32(n - 1)
    o_ref[...] = jnp.sqrt(var).astype(o_ref.dtype)


def _std_last_kernel_narrow(x_ref, o_ref):
    # Fallback: identical math, keepdims result -> width-1 (masked) stores.
    x = x_ref[...].astype(jnp.float32)
    n = x.shape[-1]
    mean = jnp.mean(x, axis=-1, keepdims=True)
    diff = x - mean
    var = jnp.sum(diff * diff, axis=-1, keepdims=True) / jnp.float32(n - 1)
    o_ref[...] = jnp.sqrt(var).astype(o_ref.dtype)


def _std_mid_kernel(x_ref, o_ref):
    # x_ref: (TILE_P, D, Q) -- reduce over the sublane axis D.
    # o_ref: (TILE_P, 1, Q) -- keepdim output, lane-major along Q.
    x = x_ref[...].astype(jnp.float32)
    n = x.shape[-2]
    mean = jnp.mean(x, axis=-2, keepdims=True)
    diff = x - mean
    var = jnp.sum(diff * diff, axis=-2, keepdims=True) / jnp.float32(n - 1)
    o_ref[...] = jnp.sqrt(var).astype(o_ref.dtype)


# ---------------------------------------------------------------------------
# Wrappers
# ---------------------------------------------------------------------------

def _std_last_axis(x):
    """std over the last axis, keepdim=True."""
    shape = x.shape
    W = shape[-1]
    R = 1
    for s in shape[:-1]:
        R *= s
    dtype = x.dtype
    itemsize = dtype.itemsize

    r128 = -(-R // _LANES)                 # number of 128-row groups
    w_pad = _round_up(W, _LANES)           # lane padding in the VMEM layout
    unit_bytes = _LANES * w_pad * itemsize  # VMEM bytes per 128-row group
    tile_b, r128_pad, grid_n = _pick_tile(r128, unit_bytes)

    rows_pad = r128_pad * _LANES
    xf = x.reshape(R, W)                   # free view: W is contiguous
    if rows_pad != R:
        # Row-only padding; padded rows are discarded after the kernel.
        xf = jnp.pad(xf, ((0, rows_pad - R), (0, 0)))
    x3 = xf.reshape(r128_pad, _LANES, W)

    vmem_limit = int(max(32 * 1024 * 1024,
                         2 * tile_b * unit_bytes + 4 * 1024 * 1024))
    params = pltpu.CompilerParams(
        dimension_semantics=("parallel",),
        vmem_limit_bytes=vmem_limit,
    )

    def _call(kernel, out_shape, out_spec):
        return pl.pallas_call(
            kernel,
            out_shape=out_shape,
            grid_spec=pltpu.PrefetchScalarGridSpec(
                num_scalar_prefetch=0,
                grid=(grid_n,),
                in_specs=[pl.BlockSpec((tile_b, _LANES, W),
                                       lambda g: (g, 0, 0))],
                out_specs=out_spec,
            ),
            compiler_params=params,
        )(x3)

    try:
        out = _call(
            _std_last_kernel_lane_dense,
            jax.ShapeDtypeStruct((r128_pad, _LANES), dtype),
            pl.BlockSpec((tile_b, _LANES), lambda g: (g, 0)),
        )
    except Exception:
        # TODO(synk): drop this fallback once the sublane->lane relayout of a
        # lane-reduced result is guaranteed on all deployed Mosaic versions.
        out = _call(
            _std_last_kernel_narrow,
            jax.ShapeDtypeStruct((r128_pad, _LANES, 1), dtype),
            pl.BlockSpec((tile_b, _LANES, 1), lambda g: (g, 0, 0)),
        )

    return out.reshape(rows_pad)[:R].reshape(shape[:-1] + (1,))


def _std_mid_axis(x, dim):
    """std over a non-last axis, keepdim=True (no HBM transpose round trip)."""
    shape = x.shape
    D = shape[dim]
    P = 1
    for s in shape[:dim]:
        P *= s
    Q = 1
    for s in shape[dim + 1:]:
        Q *= s
    dtype = x.dtype
    itemsize = dtype.itemsize

    d_pad = _round_up(D, _SUBLANES)
    q_pad = _round_up(Q, _LANES)
    unit_bytes = d_pad * q_pad * itemsize   # VMEM bytes per leading-dim unit
    tile_p, p_pad, grid_n = _pick_tile(P, unit_bytes)

    xr = x.reshape(P, D, Q)                 # free view (dims after `dim` merge)
    if p_pad != P:
        xr = jnp.pad(xr, ((0, p_pad - P), (0, 0), (0, 0)))

    vmem_limit = int(max(32 * 1024 * 1024,
                         2 * tile_p * unit_bytes + 4 * 1024 * 1024))

    out = pl.pallas_call(
        _std_mid_kernel,
        out_shape=jax.ShapeDtypeStruct((p_pad, 1, Q), dtype),
        grid_spec=pltpu.PrefetchScalarGridSpec(
            num_scalar_prefetch=0,
            grid=(grid_n,),
            in_specs=[pl.BlockSpec((tile_p, D, Q), lambda g: (g, 0, 0))],
            out_specs=pl.BlockSpec((tile_p, 1, Q), lambda g: (g, 0, 0)),
        ),
        compiler_params=pltpu.CompilerParams(
            dimension_semantics=("parallel",),
            vmem_limit_bytes=vmem_limit,
        ),
    )(xr)

    return out[:P].reshape(shape[:dim] + (1,) + shape[dim + 1:])


def std_layer(x, dim):
    """StdLayer forward: x.std(dim=dim, keepdim=True), unbiased (ddof=1)."""
    x = jnp.asarray(x)
    d = dim % x.ndim
    if d == x.ndim - 1:
        return _std_last_axis(x)
    return _std_mid_axis(x, d)


class StdLayer:
    """JAX/Pallas equivalent of the PyTorch StdLayer module."""

    def __init__(self, dim):
        self.dim = dim

    def __call__(self, x):
        return std_layer(x, self.dim)


if __name__ == "__main__":
    key = jax.random.PRNGKey(0)
    # FBCNet-style input: (batch, band*filters, channels, time); std over dim=3.
    x = jax.random.normal(key, (2, 4, 16, 16), dtype=jnp.float32)

    layer = StdLayer(dim=3)
    out = jax.block_until_ready(layer(x))
    ref = jnp.std(x, axis=3, keepdims=True, ddof=1)
    assert out.shape == (2, 4, 16, 1), out.shape
    assert jnp.allclose(out, ref, atol=1e-5, rtol=1e-5), "mismatch vs reference (dim=3)"

    # Also exercise the non-last-axis path (in-kernel sublane reduction).
    out2 = jax.block_until_ready(std_layer(x, dim=2))
    ref2 = jnp.std(x, axis=2, keepdims=True, ddof=1)
    assert out2.shape == (2, 4, 1, 16), out2.shape
    assert jnp.allclose(out2, ref2, atol=1e-5, rtol=1e-5), "mismatch vs reference (dim=2)"

    print("KERNEL_OK")
</pallas_src>

<mosaic_0001>
module attributes {stable_mosaic.version = 11 : i64} {
  func.func @_std_last_kernel_lane_dense(%arg0: i32, %arg1: memref<1x128x16xf32, #tpu.memory_space<vmem>>, %arg2: memref<1x128xf32, #tpu.memory_space<vmem>>) attributes {dimension_semantics = [#tpu.dimension_semantics<parallel>], iteration_bounds = array<i64: 1>, scalar_prefetch = 0 : i64, scratch_operands = 0 : i64, tpu.core_type = #tpu.core_type<tc>, window_params = [{transform_indices = @transform_0, window_bounds = array<i64: 1, 128, 16>}, {transform_indices = @transform_1, window_bounds = array<i64: 1, 128>}]} {
    %c0 = arith.constant 0 : index
    %c0_0 = arith.constant 0 : index
    %c0_1 = arith.constant 0 : index
    %0 = vector.load %arg1[%c0, %c0_0, %c0_1] : memref<1x128x16xf32, #tpu.memory_space<vmem>>, vector<1x128x16xf32>
    %cst = arith.constant dense<0.000000e+00> : vector<1x128xf32>
    %1 = vector.multi_reduction <add>, %0, %cst [2] : vector<1x128x16xf32> to vector<1x128xf32>
    %2 = vector.shape_cast %1 : vector<1x128xf32> to vector<1x128x1xf32>
    %cst_2 = arith.constant 1.600000e+01 : f32
    %3 = vector.broadcast %cst_2 : f32 to vector<1x128x1xf32>
    %4 = arith.divf %2, %3 : vector<1x128x1xf32>
    %5 = vector.broadcast %4 : vector<1x128x1xf32> to vector<1x128x16xf32>
    %6 = arith.subf %0, %5 : vector<1x128x16xf32>
    %7 = arith.mulf %6, %6 : vector<1x128x16xf32>
    %cst_3 = arith.constant dense<0.000000e+00> : vector<1x128xf32>
    %8 = vector.multi_reduction <add>, %7, %cst_3 [2] : vector<1x128x16xf32> to vector<1x128xf32>
    %cst_4 = arith.constant 1.500000e+01 : f32
    %9 = vector.broadcast %cst_4 : f32 to vector<1x128xf32>
    %10 = arith.divf %8, %9 : vector<1x128xf32>
    %11 = math.sqrt %10 : vector<1x128xf32>
    %c0_5 = arith.constant 0 : index
    %c0_6 = arith.constant 0 : index
    %12 = vector.load %arg2[%c0_5, %c0_6] : memref<1x128xf32, #tpu.memory_space<vmem>>, vector<1x128xf32>
    tpu.vector_store %arg2[%c0_5, %c0_6], %11 {strides = array<i32>} : memref<1x128xf32, #tpu.memory_space<vmem>>, vector<1x128xf32>,
    return
  }
  func.func @transform_0(%arg0: i32) -> (i32, i32, i32) {
    %c0_i32 = arith.constant 0 : i32
    %c0_i32_0 = arith.constant 0 : i32
    %c0_i32_1 = arith.constant 0 : i32
    return %arg0, %c0_i32, %c0_i32_0 : i32, i32, i32
  }
  func.func @transform_1(%arg0: i32) -> (i32, i32) {
    %c0_i32 = arith.constant 0 : i32
    %c0_i32_0 = arith.constant 0 : i32
    return %arg0, %c0_i32 : i32, i32
  }
}

module attributes {stable_mosaic.version = 11 : i64} {
  func.func @_std_last_kernel_narrow(%arg0: i32, %arg1: memref<1x128x16xf32, #tpu.memory_space<vmem>>, %arg2: memref<1x128x1xf32, #tpu.memory_space<vmem>>) attributes {dimension_semantics = [#tpu.dimension_semantics<parallel>], iteration_bounds = array<i64: 1>, scalar_prefetch = 0 : i64, scratch_operands = 0 : i64, tpu.core_type = #tpu.core_type<tc>, window_params = [{transform_indices = @transform_0, window_bounds = array<i64: 1, 128, 16>}, {transform_indices = @transform_1, window_bounds = array<i64: 1, 128, 1>}]} {
    %c0 = arith.constant 0 : index
    %c0_0 = arith.constant 0 : index
    %c0_1 = arith.constant 0 : index
    %0 = vector.load %arg1[%c0, %c0_0, %c0_1] : memref<1x128x16xf32, #tpu.memory_space<vmem>>, vector<1x128x16xf32>
    %cst = arith.constant dense<0.000000e+00> : vector<1x128xf32>
    %1 = vector.multi_reduction <add>, %0, %cst [2] : vector<1x128x16xf32> to vector<1x128xf32>
    %2 = vector.shape_cast %1 : vector<1x128xf32> to vector<1x128x1xf32>
    %cst_2 = arith.constant 1.600000e+01 : f32
    %3 = vector.broadcast %cst_2 : f32 to vector<1x128x1xf32>
    %4 = arith.divf %2, %3 : vector<1x128x1xf32>
    %5 = vector.broadcast %4 : vector<1x128x1xf32> to vector<1x128x16xf32>
    %6 = arith.subf %0, %5 : vector<1x128x16xf32>
    %7 = arith.mulf %6, %6 : vector<1x128x16xf32>
    %cst_3 = arith.constant dense<0.000000e+00> : vector<1x128xf32>
    %8 = vector.multi_reduction <add>, %7, %cst_3 [2] : vector<1x128x16xf32> to vector<1x128xf32>
    %9 = vector.shape_cast %8 : vector<1x128xf32> to vector<1x128x1xf32>
    %cst_4 = arith.constant 1.500000e+01 : f32
    %10 = vector.broadcast %cst_4 : f32 to vector<1x128x1xf32>
    %11 = arith.divf %9, %10 : vector<1x128x1xf32>
    %12 = math.sqrt %11 : vector<1x128x1xf32>
    %c0_5 = arith.constant 0 : index
    %c0_6 = arith.constant 0 : index
    %c0_7 = arith.constant 0 : index
    %13 = vector.load %arg2[%c0_5, %c0_6, %c0_7] : memref<1x128x1xf32, #tpu.memory_space<vmem>>, vector<1x128x1xf32>
    tpu.vector_store %arg2[%c0_5, %c0_6, %c0_7], %12 {strides = array<i32>} : memref<1x128x1xf32, #tpu.memory_space<vmem>>, vector<1x128x1xf32>,
    return
  }
  func.func @transform_0(%arg0: i32) -> (i32, i32, i32) {
    %c0_i32 = arith.constant 0 : i32
    %c0_i32_0 = arith.constant 0 : i32
    %c0_i32_1 = arith.constant 0 : i32
    return %arg0, %c0_i32, %c0_i32_0 : i32, i32, i32
  }
  func.func @transform_1(%arg0: i32) -> (i32, i32, i32) {
    %c0_i32 = arith.constant 0 : i32
    %c0_i32_0 = arith.constant 0 : i32
    %c0_i32_1 = arith.constant 0 : i32
    return %arg0, %c0_i32, %c0_i32_0 : i32, i32, i32
  }
}

</mosaic_0001>

<llo_original>
// kernel: tpu_custom_call.1
$region0: #{tpu_custom_call.1}
  #allocation0 [shape = 'u32[]', space=smem, size = 0x4, offset = 0x4, fixed_abs, tag = 'smem constant byte address 0x4 - core index']
  #allocation1 [shape = 'u32[72,128]{1,0:T(1,128)}', space=vmem, size = 0x9000, scoped, tag = 'internal scratch']
  %s0 = inlined_call_operand.vmem [shape: f32[1,128,16], index: 0, kind: input, shape index: {}]
  %s1 = inlined_call_operand.hbm [shape: f32[1,128], index: 1, kind: output, shape index: {}]
  %s2 = sld [smem:[#allocation0]]
  $region14: #{tpu_custom_call.1} parent=0
    _
  %s4 = ssub.s32 1, %s2
  %s5 = scalar_select 0, %s4, %s2
  $region1: #{tpu_custom_call.1} parent=0
    #allocation2 [shape = 'u8[512]{0}', space=vmem, size = 0x400, scoped, tag = 'output window, operand 0, single buffered']
    #allocation3 [shape = 's32[1]{0}', space=sflag, size = 0x4, scoped, tag = 'scoped memory for tpu_custom_call.1']
    %6 = vsyncpa [#allocation3], 0
    // Predicated region
    $region2: #{tpu_custom_call.1} parent=1 // pred_check
      _
    $region3: #{tpu_custom_call.1} parent=1 // pred_check_branch
      %8 = sbr.rel (0) target = $region5
    $region4: #{tpu_custom_call.1} parent=1 // pred_region
      _
    $region5: #{tpu_custom_call.1} parent=1 // pred_fallthru
      _
    %v9 = vld [vmem:[%s0] sm:$0xff]
    %v10 = vld [vmem:[%s0 + $0x8] sm:$0xff]
    %v11 = vld [vmem:[%s0 + $0x10] sm:$0xff]
    %v12 = vld [vmem:[%s0 + $0x18] sm:$0xff]
    %v13 = vld [vmem:[%s0 + $0x20] sm:$0xff]
    %v14 = vld [vmem:[%s0 + $0x28] sm:$0xff]
    %v15 = vld [vmem:[%s0 + $0x30] sm:$0xff]
    %v16 = vld [vmem:[%s0 + $0x38] sm:$0xff]
    %v17 = vld [vmem:[%s0 + $0x40] sm:$0xff]
    %v18 = vld [vmem:[%s0 + $0x48] sm:$0xff]
    %v19 = vld [vmem:[%s0 + $0x50] sm:$0xff]
    %v20 = vld [vmem:[%s0 + $0x58] sm:$0xff]
    %v21 = vld [vmem:[%s0 + $0x60] sm:$0xff]
    %v22 = vld [vmem:[%s0 + $0x68] sm:$0xff]
    %v23 = vld [vmem:[%s0 + $0x70] sm:$0xff]
    %v24 = vld [vmem:[%s0 + $0x78] sm:$0xff]
    %vm25 = vcmask 130048
    %v26 = vsel %vm25, %v9, 0.0
    %27 = vadd.xlane.f32.xlu0 %v26
    %v28 = vpop.xlane.xlu0 %27
    %v29 = vsel %vm25, %v10, 0.0
    %30 = vadd.xlane.f32.xlu0 %v29
    %v31 = vpop.xlane.xlu0 %30
    %v32 = vsel %vm25, %v11, 0.0
    %33 = vadd.xlane.f32.xlu0 %v32
    %v34 = vpop.xlane.xlu0 %33
    %v35 = vsel %vm25, %v12, 0.0
    %36 = vadd.xlane.f32.xlu0 %v35
    %v37 = vpop.xlane.xlu0 %36
    %v38 = vsel %vm25, %v13, 0.0
    %39 = vadd.xlane.f32.xlu0 %v38
    %v40 = vpop.xlane.xlu0 %39
    %v41 = vsel %vm25, %v14, 0.0
    %42 = vadd.xlane.f32.xlu0 %v41
    %v43 = vpop.xlane.xlu0 %42
    %v44 = vsel %vm25, %v15, 0.0
    %45 = vadd.xlane.f32.xlu0 %v44
    %v46 = vpop.xlane.xlu0 %45
    %v47 = vsel %vm25, %v16, 0.0
    %48 = vadd.xlane.f32.xlu0 %v47
    %v49 = vpop.xlane.xlu0 %48
    %v50 = vsel %vm25, %v17, 0.0
    %51 = vadd.xlane.f32.xlu0 %v50
    %v52 = vpop.xlane.xlu0 %51
    %v53 = vsel %vm25, %v18, 0.0
    %54 = vadd.xlane.f32.xlu0 %v53
    %v55 = vpop.xlane.xlu0 %54
    %v56 = vsel %vm25, %v19, 0.0
    %57 = vadd.xlane.f32.xlu0 %v56
    %v58 = vpop.xlane.xlu0 %57
    %v59 = vsel %vm25, %v20, 0.0
    %60 = vadd.xlane.f32.xlu0 %v59
    %v61 = vpop.xlane.xlu0 %60
    %v62 = vsel %vm25, %v21, 0.0
    %63 = vadd.xlane.f32.xlu0 %v62
    %v64 = vpop.xlane.xlu0 %63
    %v65 = vsel %vm25, %v22, 0.0
    %66 = vadd.xlane.f32.xlu0 %v65
    %v67 = vpop.xlane.xlu0 %66
    %v68 = vsel %vm25, %v23, 0.0
    %69 = vadd.xlane.f32.xlu0 %v68
    %v70 = vpop.xlane.xlu0 %69
    %v71 = vsel %vm25, %v24, 0.0
    %72 = vadd.xlane.f32.xlu0 %v71
    %v73 = vpop.xlane.xlu0 %72
    %v74 = vrcp.pop 16.0
    %v75 = vmul.f32 16.0, %v74
    %v76 = vsub.f32 1.0, %v75
    %v77 = vmul.f32 %v74, %v76
    %v78 = vadd.f32 %v74, %v77
    %vm79 = vweird.f32 %v74
    %v80 = vsel %vm79, %v74, %v78
    %v81 = vmul.f32 %v28, %v80
    %v82 = vmul.f32 %v31, %v80
    %v83 = vmul.f32 %v34, %v80
    %v84 = vmul.f32 %v37, %v80
    %v85 = vmul.f32 %v40, %v80
    %v86 = vmul.f32 %v43, %v80
    %v87 = vmul.f32 %v46, %v80
    %v88 = vmul.f32 %v49, %v80
    %v89 = vmul.f32 %v52, %v80
    %v90 = vmul.f32 %v55, %v80
    %v91 = vmul.f32 %v58, %v80
    %v92 = vmul.f32 %v61, %v80
    %v93 = vmul.f32 %v64, %v80
    %v94 = vmul.f32 %v67, %v80
    %v95 = vmul.f32 %v70, %v80
    %v96 = vmul.f32 %v73, %v80
    %v97 = vsub.f32 %v9, %v81
    %v98 = vsub.f32 %v10, %v82
    %v99 = vsub.f32 %v11, %v83
    %v100 = vsub.f32 %v12, %v84
    %v101 = vsub.f32 %v13, %v85
    %v102 = vsub.f32 %v14, %v86
    %v103 = vsub.f32 %v15, %v87
    %v104 = vsub.f32 %v16, %v88
    %v105 = vsub.f32 %v17, %v89
    %v106 = vsub.f32 %v18, %v90
    %v107 = vsub.f32 %v19, %v91
    %v108 = vsub.f32 %v20, %v92
    %v109 = vsub.f32 %v21, %v93
    %v110 = vsub.f32 %v22, %v94
    %v111 = vsub.f32 %v23, %v95
    %v112 = vsub.f32 %v24, %v96
    %v113 = vmul.f32 %v97, %v97
    %v114 = vmul.f32 %v98, %v98
    %v115 = vmul.f32 %v99, %v99
    %v116 = vmul.f32 %v100, %v100
    %v117 = vmul.f32 %v101, %v101
    %v118 = vmul.f32 %v102, %v102
    %v119 = vmul.f32 %v103, %v103
    %v120 = vmul.f32 %v104, %v104
    %v121 = vmul.f32 %v105, %v105
    %v122 = vmul.f32 %v106, %v106
    %v123 = vmul.f32 %v107, %v107
    %v124 = vmul.f32 %v108, %v108
    %v125 = vmul.f32 %v109, %v109
    %v126 = vmul.f32 %v110, %v110
    %v127 = vmul.f32 %v111, %v111
    %v128 = vmul.f32 %v112, %v112
    %v129 = vsel %vm25, %v113, 0.0
    %130 = vadd.xlane.f32.xlu0 %v129
    %v131 = vpop.xlane.xlu0 %130
    %v132 = vsel %vm25, %v114, 0.0
    %133 = vadd.xlane.f32.xlu0 %v132
    %v134 = vpop.xlane.xlu0 %133
    %v135 = vsel %vm25, %v115, 0.0
    %136 = vadd.xlane.f32.xlu0 %v135
    %v137 = vpop.xlane.xlu0 %136
    %v138 = vsel %vm25, %v116, 0.0
    %139 = vadd.xlane.f32.xlu0 %v138
    %v140 = vpop.xlane.xlu0 %139
    %v141 = vsel %vm25, %v117, 0.0
    %142 = vadd.xlane.f32.xlu0 %v141
    %v143 = vpop.xlane.xlu0 %142
    %v144 = vsel %vm25, %v118, 0.0
    %145 = vadd.xlane.f32.xlu0 %v144
    %v146 = vpop.xlane.xlu0 %145
    %v147 = vsel %vm25, %v119, 0.0
    %148 = vadd.xlane.f32.xlu0 %v147
    %v149 = vpop.xlane.xlu0 %148
    %v150 = vsel %vm25, %v120, 0.0
    %151 = vadd.xlane.f32.xlu0 %v150
    %v152 = vpop.xlane.xlu0 %151
    %v153 = vsel %vm25, %v121, 0.0
    %154 = vadd.xlane.f32.xlu0 %v153
    %v155 = vpop.xlane.xlu0 %154
    %v156 = vsel %vm25, %v122, 0.0
    %157 = vadd.xlane.f32.xlu0 %v156
    %v158 = vpop.xlane.xlu0 %157
    %v159 = vsel %vm25, %v123, 0.0
    %160 = vadd.xlane.f32.xlu0 %v159
    %v161 = vpop.xlane.xlu0 %160
    %v162 = vsel %vm25, %v124, 0.0
    %163 = vadd.xlane.f32.xlu0 %v162
    %v164 = vpop.xlane.xlu0 %163
    %v165 = vsel %vm25, %v125, 0.0
    %166 = vadd.xlane.f32.xlu0 %v165
    %v167 = vpop.xlane.xlu0 %166
    %v168 = vsel %vm25, %v126, 0.0
    %169 = vadd.xlane.f32.xlu0 %v168
    %v170 = vpop.xlane.xlu0 %169
    %v171 = vsel %vm25, %v127, 0.0
    %172 = vadd.xlane.f32.xlu0 %v171
    %v173 = vpop.xlane.xlu0 %172
    %v174 = vsel %vm25, %v128, 0.0
    %175 = vadd.xlane.f32.xlu0 %v174
    %v176 = vpop.xlane.xlu0 %175
    %v177 = vrcp.pop 15.0
    %v178 = vmul.f32 15.0, %v177
    %v179 = vsub.f32 1.0, %v178
    %v180 = vmul.f32 %v177, %v179
    %v181 = vadd.f32 %v177, %v180
    %vm182 = vweird.f32 %v177
    %v183 = vsel %vm182, %v177, %v181
    %v184 = vmul.f32 %v131, %v183
    %v185 = vmul.f32 %v134, %v183
    %v186 = vmul.f32 %v137, %v183
    %v187 = vmul.f32 %v140, %v183
    %v188 = vmul.f32 %v143, %v183
    %v189 = vmul.f32 %v146, %v183
    %v190 = vmul.f32 %v149, %v183
    %v191 = vmul.f32 %v152, %v183
    %v192 = vmul.f32 %v155, %v183
    %v193 = vmul.f32 %v158, %v183
    %v194 = vmul.f32 %v161, %v183
    %v195 = vmul.f32 %v164, %v183
    %v196 = vmul.f32 %v167, %v183
    %v197 = vmul.f32 %v170, %v183
    %v198 = vmul.f32 %v173, %v183
    %v199 = vmul.f32 %v176, %v183
    %v200 = vrsqrt.pop %v184
    %v201 = vmul.f32 %v200, %v184
    %v202 = vmul.f32 %v201, %v200
    %v203 = vmul.f32 0.5, %v202
    %v204 = vsub.f32 1.5, %v203
    %v205 = vmul.f32 %v200, %v204
    %v206 = vmul.f32 %v184, %v205
    %vm207 = vcmp.eq.f32.partialorder %v184, inf
    %v208 = vsel %vm207, %v184, %v206
    %vm209 = vcmp.eq.f32.partialorder %v184, 0.0
    %v210 = vand.u32 %v184, 2147483648
    %v211 = vsel %vm209, %v210, %v208
    %v212 = vrsqrt.pop %v185
    %v213 = vmul.f32 %v212, %v185
    %v214 = vmul.f32 %v213, %v212
    %v215 = vmul.f32 0.5, %v214
    %v216 = vsub.f32 1.5, %v215
    %v217 = vmul.f32 %v212, %v216
    %v218 = vmul.f32 %v185, %v217
    %vm219 = vcmp.eq.f32.partialorder %v185, inf
    %v220 = vsel %vm219, %v185, %v218
    %vm221 = vcmp.eq.f32.partialorder %v185, 0.0
    %v222 = vand.u32 %v185, 2147483648
    %v223 = vsel %vm221, %v222, %v220
    %v224 = vrsqrt.pop %v186
    %v225 = vmul.f32 %v224, %v186
    %v226 = vmul.f32 %v225, %v224
    %v227 = vmul.f32 0.5, %v226
    %v228 = vsub.f32 1.5, %v227
    %v229 = vmul.f32 %v224, %v228
    %v230 = vmul.f32 %v186, %v229
    %vm231 = vcmp.eq.f32.partialorder %v186, inf
    %v232 = vsel %vm231, %v186, %v230
    %vm233 = vcmp.eq.f32.partialorder %v186, 0.0
    %v234 = vand.u32 %v186, 2147483648
    %v235 = vsel %vm233, %v234, %v232
    %v236 = vrsqrt.pop %v187
    %v237 = vmul.f32 %v236, %v187
    %v238 = vmul.f32 %v237, %v236
    %v239 = vmul.f32 0.5, %v238
    %v240 = vsub.f32 1.5, %v239
    %v241 = vmul.f32 %v236, %v240
    %v242 = vmul.f32 %v187, %v241
    %vm243 = vcmp.eq.f32.partialorder %v187, inf
    %v244 = vsel %vm243, %v187, %v242
    %vm245 = vcmp.eq.f32.partialorder %v187, 0.0
    %v246 = vand.u32 %v187, 2147483648
    %v247 = vsel %vm245, %v246, %v244
    %v248 = vrsqrt.pop %v188
    %v249 = vmul.f32 %v248, %v188
    %v250 = vmul.f32 %v249, %v248
    %v251 = vmul.f32 0.5, %v250
    %v252 = vsub.f32 1.5, %v251
    %v253 = vmul.f32 %v248, %v252
    %v254 = vmul.f32 %v188, %v253
    %vm255 = vcmp.eq.f32.partialorder %v188, inf
    %v256 = vsel %vm255, %v188, %v254
    %vm257 = vcmp.eq.f32.partialorder %v188, 0.0
    %v258 = vand.u32 %v188, 2147483648
    %v259 = vsel %vm257, %v258, %v256
    %v260 = vrsqrt.pop %v189
    %v261 = vmul.f32 %v260, %v189
    %v262 = vmul.f32 %v261, %v260
    %v263 = vmul.f32 0.5, %v262
    %v264 = vsub.f32 1.5, %v263
    %v265 = vmul.f32 %v260, %v264
    %v266 = vmul.f32 %v189, %v265
    %vm267 = vcmp.eq.f32.partialorder %v189, inf
    %v268 = vsel %vm267, %v189, %v266
    %vm269 = vcmp.eq.f32.partialorder %v189, 0.0
    %v270 = vand.u32 %v189, 2147483648
    %v271 = vsel %vm269, %v270, %v268
    %v272 = vrsqrt.pop %v190
    %v273 = vmul.f32 %v272, %v190
    %v274 = vmul.f32 %v273, %v272
    %v275 = vmul.f32 0.5, %v274
    %v276 = vsub.f32 1.5, %v275
    %v277 = vmul.f32 %v272, %v276
    %v278 = vmul.f32 %v190, %v277
    %vm279 = vcmp.eq.f32.partialorder %v190, inf
    %v280 = vsel %vm279, %v190, %v278
    %vm281 = vcmp.eq.f32.partialorder %v190, 0.0
    %v282 = vand.u32 %v190, 2147483648
    %v283 = vsel %vm281, %v282, %v280
    %v284 = vrsqrt.pop %v191
    %v285 = vmul.f32 %v284, %v191
    %v286 = vmul.f32 %v285, %v284
    %v287 = vmul.f32 0.5, %v286
    %v288 = vsub.f32 1.5, %v287
    %v289 = vmul.f32 %v284, %v288
    %v290 = vmul.f32 %v191, %v289
    %vm291 = vcmp.eq.f32.partialorder %v191, inf
    %v292 = vsel %vm291, %v191, %v290
    %vm293 = vcmp.eq.f32.partialorder %v191, 0.0
    %v294 = vand.u32 %v191, 2147483648
    %v295 = vsel %vm293, %v294, %v292
    %v296 = vrsqrt.pop %v192
    %v297 = vmul.f32 %v296, %v192
    %v298 = vmul.f32 %v297, %v296
    %v299 = vmul.f32 0.5, %v298
    %v300 = vsub.f32 1.5, %v299
    %v301 = vmul.f32 %v296, %v300
    %v302 = vmul.f32 %v192, %v301
    %vm303 = vcmp.eq.f32.partialorder %v192, inf
    %v304 = vsel %vm303, %v192, %v302
    %vm305 = vcmp.eq.f32.partialorder %v192, 0.0
    %v306 = vand.u32 %v192, 2147483648
    %v307 = vsel %vm305, %v306, %v304
    %v308 = vrsqrt.pop %v193
    %v309 = vmul.f32 %v308, %v193
    %v310 = vmul.f32 %v309, %v308
    %v311 = vmul.f32 0.5, %v310
    %v312 = vsub.f32 1.5, %v311
    %v313 = vmul.f32 %v308, %v312
    %v314 = vmul.f32 %v193, %v313
    %vm315 = vcmp.eq.f32.partialorder %v193, inf
    %v316 = vsel %vm315, %v193, %v314
    %vm317 = vcmp.eq.f32.partialorder %v193, 0.0
    %v318 = vand.u32 %v193, 2147483648
    %v319 = vsel %vm317, %v318, %v316
    %v320 = vrsqrt.pop %v194
    %v321 = vmul.f32 %v320, %v194
    %v322 = vmul.f32 %v321, %v320
    %v323 = vmul.f32 0.5, %v322
    %v324 = vsub.f32 1.5, %v323
    %v325 = vmul.f32 %v320, %v324
    %v326 = vmul.f32 %v194, %v325
    %vm327 = vcmp.eq.f32.partialorder %v194, inf
    %v328 = vsel %vm327, %v194, %v326
    %vm329 = vcmp.eq.f32.partialorder %v194, 0.0
    %v330 = vand.u32 %v194, 2147483648
    %v331 = vsel %vm329, %v330, %v328
    %v332 = vrsqrt.pop %v195
    %v333 = vmul.f32 %v332, %v195
    %v334 = vmul.f32 %v333, %v332
    %v335 = vmul.f32 0.5, %v334
    %v336 = vsub.f32 1.5, %v335
    %v337 = vmul.f32 %v332, %v336
    %v338 = vmul.f32 %v195, %v337
    %vm339 = vcmp.eq.f32.partialorder %v195, inf
    %v340 = vsel %vm339, %v195, %v338
    %vm341 = vcmp.eq.f32.partialorder %v195, 0.0
    %v342 = vand.u32 %v195, 2147483648
    %v343 = vsel %vm341, %v342, %v340
    %v344 = vrsqrt.pop %v196
    %v345 = vmul.f32 %v344, %v196
    %v346 = vmul.f32 %v345, %v344
    %v347 = vmul.f32 0.5, %v346
    %v348 = vsub.f32 1.5, %v347
    %v349 = vmul.f32 %v344, %v348
    %v350 = vmul.f32 %v196, %v349
    %vm351 = vcmp.eq.f32.partialorder %v196, inf
    %v352 = vsel %vm351, %v196, %v350
    %vm353 = vcmp.eq.f32.partialorder %v196, 0.0
    %v354 = vand.u32 %v196, 2147483648
    %v355 = vsel %vm353, %v354, %v352
    %v356 = vrsqrt.pop %v197
    %v357 = vmul.f32 %v356, %v197
    %v358 = vmul.f32 %v357, %v356
    %v359 = vmul.f32 0.5, %v358
    %v360 = vsub.f32 1.5, %v359
    %v361 = vmul.f32 %v356, %v360
    %v362 = vmul.f32 %v197, %v361
    %vm363 = vcmp.eq.f32.partialorder %v197, inf
    %v364 = vsel %vm363, %v197, %v362
    %vm365 = vcmp.eq.f32.partialorder %v197, 0.0
    %v366 = vand.u32 %v197, 2147483648
    %v367 = vsel %vm365, %v366, %v364
    %v368 = vrsqrt.pop %v198
    %v369 = vmul.f32 %v368, %v198
    %v370 = vmul.f32 %v369, %v368
    %v371 = vmul.f32 0.5, %v370
    %v372 = vsub.f32 1.5, %v371
    %v373 = vmul.f32 %v368, %v372
    %v374 = vmul.f32 %v198, %v373
    %vm375 = vcmp.eq.f32.partialorder %v198, inf
    %v376 = vsel %vm375, %v198, %v374
    %vm377 = vcmp.eq.f32.partialorder %v198, 0.0
    %v378 = vand.u32 %v198, 2147483648
    %v379 = vsel %vm377, %v378, %v376
    %v380 = vrsqrt.pop %v199
    %v381 = vmul.f32 %v380, %v199
    %v382 = vmul.f32 %v381, %v380
    %v383 = vmul.f32 0.5, %v382
    %v384 = vsub.f32 1.5, %v383
    %v385 = vmul.f32 %v380, %v384
    %v386 = vmul.f32 %v199, %v385
    %vm387 = vcmp.eq.f32.partialorder %v199, inf
    %v388 = vsel %vm387, %v199, %v386
    %vm389 = vcmp.eq.f32.partialorder %v199, 0.0
    %v390 = vand.u32 %v199, 2147483648
    %v391 = vsel %vm389, %v390, %v388
    %v408 = vlaneseq
    %v409 = vand.u32 %v408, 127
    %v410 = vperm.slane %v211, %v409
    %v411 = vadd.s32 %v409, 4294967288
    %v412 = vperm.slane %v223, %v411
    %vm413 = vcmask 130112
    %v414 = vsel %vm413, %v412, %v410
    %v415 = vadd.s32 %v409, 4294967280
    %v416 = vperm.slane %v235, %v415
    %vm417 = vcmask 195712
    %v418 = vsel %vm417, %v416, %v414
    %v419 = vadd.s32 %v409, 4294967272
    %v420 = vperm.slane %v247, %v419
    %vm421 = vcmask 261312
    %v422 = vsel %vm421, %v420, %v418
    %v423 = vadd.s32 %v409, 4294967264
    %v424 = vperm.slane %v259, %v423
    %vm425 = vcmask 326912
    %v426 = vsel %vm425, %v424, %v422
    %v427 = vadd.s32 %v409, 4294967256
    %v428 = vperm.slane %v271, %v427
    %vm429 = vcmask 392512
    %v430 = vsel %vm429, %v428, %v426
    %v431 = vadd.s32 %v409, 4294967248
    %v432 = vperm.slane %v283, %v431
    %vm433 = vcmask 458112
    %v434 = vsel %vm433, %v432, %v430
    %v435 = vadd.s32 %v409, 4294967240
    %v436 = vperm.slane %v295, %v435
    %vm437 = vcmask 523712
    %v438 = vsel %vm437, %v436, %v434
    %v439 = vadd.s32 %v409, 4294967232
    %v440 = vperm.slane %v307, %v439
    %vm441 = vcmask 589312
    %v442 = vsel %vm441, %v440, %v438
    %v443 = vadd.s32 %v409, 4294967224
    %v444 = vperm.slane %v319, %v443
    %vm445 = vcmask 654912
    %v446 = vsel %vm445, %v444, %v442
    %v447 = vadd.s32 %v409, 4294967216
    %v448 = vperm.slane %v331, %v447
    %vm449 = vcmask 720512
    %v450 = vsel %vm449, %v448, %v446
    %v451 = vadd.s32 %v409, 4294967208
    %v452 = vperm.slane %v343, %v451
    %vm453 = vcmask 786112
    %v454 = vsel %vm453, %v452, %v450
    %v455 = vadd.s32 %v409, 4294967200
    %v456 = vperm.slane %v355, %v455
    %vm457 = vcmask 851712
    %v458 = vsel %vm457, %v456, %v454
    %v459 = vadd.s32 %v409, 4294967192
    %v460 = vperm.slane %v367, %v459
    %vm461 = vcmask 917312
    %v462 = vsel %vm461, %v460, %v458
    %v463 = vadd.s32 %v409, 4294967184
    %v464 = vperm.slane %v379, %v463
    %vm465 = vcmask 982912
    %v466 = vsel %vm465, %v464, %v462
    %v467 = vadd.s32 %v409, 4294967176
    %v468 = vperm.slane %v391, %v467
    %vm469 = vcmask 1048512
    %v470 = vsel %vm469, %v468, %v466
    %472 = vst [vmem:[#allocation2] sm:$0x1] %v470
    // Predicated region
    $region6: #{tpu_custom_call.1} parent=1 // pred_check
      _
    $region7: #{tpu_custom_call.1} parent=1 // pred_check_branch
      %474 = sbr.rel (0) target = $region9
    $region8: #{tpu_custom_call.1} parent=1 // pred_region
      %476 = vsyncadd [#allocation3], 0
      %s478 = sshll.u32 [#allocation2], 4
      %s479 = int_to_ptr.vmem [resolvable:$true] %s478
      %s480 = sshll.u32 %s1, 4
      %s481 = int_to_ptr.hbm [resolvable:$true] %s480
      %483 = dma.vmem_to_hbm [thread:$0]  %s479, 16, %s481, [#allocation3]
    $region9: #{tpu_custom_call.1} parent=1 // pred_fallthru
      _
    // Predicated region
    $region10: #{tpu_custom_call.1} parent=1 // pred_check
      _
    $region11: #{tpu_custom_call.1} parent=1 // pred_check_branch
      %485 = sbr.rel (0) target = $region13
    $region12: #{tpu_custom_call.1} parent=1 // pred_region
      %487 = dma.done [#allocation3], 16
    $region13: #{tpu_custom_call.1} parent=1 // pred_fallthru
      _
    %488 = vsyncpa [#allocation3], 1

// kernel: tpu_custom_call.1
$region0: #{tpu_custom_call.1}
  #allocation0 [shape = 'u32[]', space=smem, size = 0x4, offset = 0x4, fixed_abs, tag = 'smem constant byte address 0x4 - core index']
  #allocation1 [shape = 'u32[72,128]{1,0:T(1,128)}', space=vmem, size = 0x9000, scoped, tag = 'internal scratch']
  %s0 = inlined_call_operand.vmem [shape: f32[1,128,16], index: 0, kind: input, shape index: {}]
  %s1 = inlined_call_operand.vmem [shape: f32[1,128,1], index: 1, kind: output, shape index: {}]
  %s2 = sld [smem:[#allocation0]]
  $region14: #{tpu_custom_call.1} parent=0
    _
  %s4 = ssub.s32 1, %s2
  %s5 = scalar_select 0, %s4, %s2
  // Predicated region
  $region2: #{tpu_custom_call.1} parent=0 // pred_check
    _
  $region3: #{tpu_custom_call.1} parent=0 // pred_check_branch
    %7 = sbr.rel (0) target = $region5
  $region4: #{tpu_custom_call.1} parent=0 // pred_region
    _
  $region5: #{tpu_custom_call.1} parent=0 // pred_fallthru
    _
  %v8 = vld [vmem:[%s0] sm:$0xff]
  %v9 = vld [vmem:[%s0 + $0x8] sm:$0xff]
  %v10 = vld [vmem:[%s0 + $0x10] sm:$0xff]
  %v11 = vld [vmem:[%s0 + $0x18] sm:$0xff]
  %v12 = vld [vmem:[%s0 + $0x20] sm:$0xff]
  %v13 = vld [vmem:[%s0 + $0x28] sm:$0xff]
  %v14 = vld [vmem:[%s0 + $0x30] sm:$0xff]
  %v15 = vld [vmem:[%s0 + $0x38] sm:$0xff]
  %v16 = vld [vmem:[%s0 + $0x40] sm:$0xff]
  %v17 = vld [vmem:[%s0 + $0x48] sm:$0xff]
  %v18 = vld [vmem:[%s0 + $0x50] sm:$0xff]
  %v19 = vld [vmem:[%s0 + $0x58] sm:$0xff]
  %v20 = vld [vmem:[%s0 + $0x60] sm:$0xff]
  %v21 = vld [vmem:[%s0 + $0x68] sm:$0xff]
  %v22 = vld [vmem:[%s0 + $0x70] sm:$0xff]
  %v23 = vld [vmem:[%s0 + $0x78] sm:$0xff]
  %vm24 = vcmask 130048
  %v25 = vsel %vm24, %v8, 0.0
  %26 = vadd.xlane.f32.xlu0 %v25
  %v27 = vpop.xlane.xlu0 %26
  %v28 = vsel %vm24, %v9, 0.0
  %29 = vadd.xlane.f32.xlu0 %v28
  %v30 = vpop.xlane.xlu0 %29
  %v31 = vsel %vm24, %v10, 0.0
  %32 = vadd.xlane.f32.xlu0 %v31
  %v33 = vpop.xlane.xlu0 %32
  %v34 = vsel %vm24, %v11, 0.0
  %35 = vadd.xlane.f32.xlu0 %v34
  %v36 = vpop.xlane.xlu0 %35
  %v37 = vsel %vm24, %v12, 0.0
  %38 = vadd.xlane.f32.xlu0 %v37
  %v39 = vpop.xlane.xlu0 %38
  %v40 = vsel %vm24, %v13, 0.0
  %41 = vadd.xlane.f32.xlu0 %v40
  %v42 = vpop.xlane.xlu0 %41
  %v43 = vsel %vm24, %v14, 0.0
  %44 = vadd.xlane.f32.xlu0 %v43
  %v45 = vpop.xlane.xlu0 %44
  %v46 = vsel %vm24, %v15, 0.0
  %47 = vadd.xlane.f32.xlu0 %v46
  %v48 = vpop.xlane.xlu0 %47
  %v49 = vsel %vm24, %v16, 0.0
  %50 = vadd.xlane.f32.xlu0 %v49
  %v51 = vpop.xlane.xlu0 %50
  %v52 = vsel %vm24, %v17, 0.0
  %53 = vadd.xlane.f32.xlu0 %v52
  %v54 = vpop.xlane.xlu0 %53
  %v55 = vsel %vm24, %v18, 0.0
  %56 = vadd.xlane.f32.xlu0 %v55
  %v57 = vpop.xlane.xlu0 %56
  %v58 = vsel %vm24, %v19, 0.0
  %59 = vadd.xlane.f32.xlu0 %v58
  %v60 = vpop.xlane.xlu0 %59
  %v61 = vsel %vm24, %v20, 0.0
  %62 = vadd.xlane.f32.xlu0 %v61
  %v63 = vpop.xlane.xlu0 %62
  %v64 = vsel %vm24, %v21, 0.0
  %65 = vadd.xlane.f32.xlu0 %v64
  %v66 = vpop.xlane.xlu0 %65
  %v67 = vsel %vm24, %v22, 0.0
  %68 = vadd.xlane.f32.xlu0 %v67
  %v69 = vpop.xlane.xlu0 %68
  %v70 = vsel %vm24, %v23, 0.0
  %71 = vadd.xlane.f32.xlu0 %v70
  %v72 = vpop.xlane.xlu0 %71
  %v73 = vrcp.pop 16.0
  %v74 = vmul.f32 16.0, %v73
  %v75 = vsub.f32 1.0, %v74
  %v76 = vmul.f32 %v73, %v75
  %v77 = vadd.f32 %v73, %v76
  %vm78 = vweird.f32 %v73
  %v79 = vsel %vm78, %v73, %v77
  %v80 = vmul.f32 %v27, %v79
  %v81 = vmul.f32 %v30, %v79
  %v82 = vmul.f32 %v33, %v79
  %v83 = vmul.f32 %v36, %v79
  %v84 = vmul.f32 %v39, %v79
  %v85 = vmul.f32 %v42, %v79
  %v86 = vmul.f32 %v45, %v79
  %v87 = vmul.f32 %v48, %v79
  %v88 = vmul.f32 %v51, %v79
  %v89 = vmul.f32 %v54, %v79
  %v90 = vmul.f32 %v57, %v79
  %v91 = vmul.f32 %v60, %v79
  %v92 = vmul.f32 %v63, %v79
  %v93 = vmul.f32 %v66, %v79
  %v94 = vmul.f32 %v69, %v79
  %v95 = vmul.f32 %v72, %v79
  %v96 = vsub.f32 %v8, %v80
  %v97 = vsub.f32 %v9, %v81
  %v98 = vsub.f32 %v10, %v82
  %v99 = vsub.f32 %v11, %v83
  %v100 = vsub.f32 %v12, %v84
  %v101 = vsub.f32 %v13, %v85
  %v102 = vsub.f32 %v14, %v86
  %v103 = vsub.f32 %v15, %v87
  %v104 = vsub.f32 %v16, %v88
  %v105 = vsub.f32 %v17, %v89
  %v106 = vsub.f32 %v18, %v90
  %v107 = vsub.f32 %v19, %v91
  %v108 = vsub.f32 %v20, %v92
  %v109 = vsub.f32 %v21, %v93
  %v110 = vsub.f32 %v22, %v94
  %v111 = vsub.f32 %v23, %v95
  %v112 = vmul.f32 %v96, %v96
  %v113 = vmul.f32 %v97, %v97
  %v114 = vmul.f32 %v98, %v98
  %v115 = vmul.f32 %v99, %v99
  %v116 = vmul.f32 %v100, %v100
  %v117 = vmul.f32 %v101, %v101
  %v118 = vmul.f32 %v102, %v102
  %v119 = vmul.f32 %v103, %v103
  %v120 = vmul.f32 %v104, %v104
  %v121 = vmul.f32 %v105, %v105
  %v122 = vmul.f32 %v106, %v106
  %v123 = vmul.f32 %v107, %v107
  %v124 = vmul.f32 %v108, %v108
  %v125 = vmul.f32 %v109, %v109
  %v126 = vmul.f32 %v110, %v110
  %v127 = vmul.f32 %v111, %v111
  %v128 = vsel %vm24, %v112, 0.0
  %129 = vadd.xlane.f32.xlu0 %v128
  %v130 = vpop.xlane.xlu0 %129
  %v131 = vsel %vm24, %v113, 0.0
  %132 = vadd.xlane.f32.xlu0 %v131
  %v133 = vpop.xlane.xlu0 %132
  %v134 = vsel %vm24, %v114, 0.0
  %135 = vadd.xlane.f32.xlu0 %v134
  %v136 = vpop.xlane.xlu0 %135
  %v137 = vsel %vm24, %v115, 0.0
  %138 = vadd.xlane.f32.xlu0 %v137
  %v139 = vpop.xlane.xlu0 %138
  %v140 = vsel %vm24, %v116, 0.0
  %141 = vadd.xlane.f32.xlu0 %v140
  %v142 = vpop.xlane.xlu0 %141
  %v143 = vsel %vm24, %v117, 0.0
  %144 = vadd.xlane.f32.xlu0 %v143
  %v145 = vpop.xlane.xlu0 %144
  %v146 = vsel %vm24, %v118, 0.0
  %147 = vadd.xlane.f32.xlu0 %v146
  %v148 = vpop.xlane.xlu0 %147
  %v149 = vsel %vm24, %v119, 0.0
  %150 = vadd.xlane.f32.xlu0 %v149
  %v151 = vpop.xlane.xlu0 %150
  %v152 = vsel %vm24, %v120, 0.0
  %153 = vadd.xlane.f32.xlu0 %v152
  %v154 = vpop.xlane.xlu0 %153
  %v155 = vsel %vm24, %v121, 0.0
  %156 = vadd.xlane.f32.xlu0 %v155
  %v157 = vpop.xlane.xlu0 %156
  %v158 = vsel %vm24, %v122, 0.0
  %159 = vadd.xlane.f32.xlu0 %v158
  %v160 = vpop.xlane.xlu0 %159
  %v161 = vsel %vm24, %v123, 0.0
  %162 = vadd.xlane.f32.xlu0 %v161
  %v163 = vpop.xlane.xlu0 %162
  %v164 = vsel %vm24, %v124, 0.0
  %165 = vadd.xlane.f32.xlu0 %v164
  %v166 = vpop.xlane.xlu0 %165
  %v167 = vsel %vm24, %v125, 0.0
  %168 = vadd.xlane.f32.xlu0 %v167
  %v169 = vpop.xlane.xlu0 %168
  %v170 = vsel %vm24, %v126, 0.0
  %171 = vadd.xlane.f32.xlu0 %v170
  %v172 = vpop.xlane.xlu0 %171
  %v173 = vsel %vm24, %v127, 0.0
  %174 = vadd.xlane.f32.xlu0 %v173
  %v175 = vpop.xlane.xlu0 %174
  %v176 = vrcp.pop 15.0
  %v177 = vmul.f32 15.0, %v176
  %v178 = vsub.f32 1.0, %v177
  %v179 = vmul.f32 %v176, %v178
  %v180 = vadd.f32 %v176, %v179
  %vm181 = vweird.f32 %v176
  %v182 = vsel %vm181, %v176, %v180
  %v183 = vmul.f32 %v130, %v182
  %v184 = vmul.f32 %v133, %v182
  %v185 = vmul.f32 %v136, %v182
  %v186 = vmul.f32 %v139, %v182
  %v187 = vmul.f32 %v142, %v182
  %v188 = vmul.f32 %v145, %v182
  %v189 = vmul.f32 %v148, %v182
  %v190 = vmul.f32 %v151, %v182
  %v191 = vmul.f32 %v154, %v182
  %v192 = vmul.f32 %v157, %v182
  %v193 = vmul.f32 %v160, %v182
  %v194 = vmul.f32 %v163, %v182
  %v195 = vmul.f32 %v166, %v182
  %v196 = vmul.f32 %v169, %v182
  %v197 = vmul.f32 %v172, %v182
  %v198 = vmul.f32 %v175, %v182
  %v199 = vrsqrt.pop %v183
  %v200 = vmul.f32 %v199, %v183
  %v201 = vmul.f32 %v200, %v199
  %v202 = vmul.f32 0.5, %v201
  %v203 = vsub.f32 1.5, %v202
  %v204 = vmul.f32 %v199, %v203
  %v205 = vmul.f32 %v183, %v204
  %vm206 = vcmp.eq.f32.partialorder %v183, inf
  %v207 = vsel %vm206, %v183, %v205
  %vm208 = vcmp.eq.f32.partialorder %v183, 0.0
  %v209 = vand.u32 %v183, 2147483648
  %v210 = vsel %vm208, %v209, %v207
  %v211 = vrsqrt.pop %v184
  %v212 = vmul.f32 %v211, %v184
  %v213 = vmul.f32 %v212, %v211
  %v214 = vmul.f32 0.5, %v213
  %v215 = vsub.f32 1.5, %v214
  %v216 = vmul.f32 %v211, %v215
  %v217 = vmul.f32 %v184, %v216
  %vm218 = vcmp.eq.f32.partialorder %v184, inf
  %v219 = vsel %vm218, %v184, %v217
  %vm220 = vcmp.eq.f32.partialorder %v184, 0.0
  %v221 = vand.u32 %v184, 2147483648
  %v222 = vsel %vm220, %v221, %v219
  %v223 = vrsqrt.pop %v185
  %v224 = vmul.f32 %v223, %v185
  %v225 = vmul.f32 %v224, %v223
  %v226 = vmul.f32 0.5, %v225
  %v227 = vsub.f32 1.5, %v226
  %v228 = vmul.f32 %v223, %v227
  %v229 = vmul.f32 %v185, %v228
  %vm230 = vcmp.eq.f32.partialorder %v185, inf
  %v231 = vsel %vm230, %v185, %v229
  %vm232 = vcmp.eq.f32.partialorder %v185, 0.0
  %v233 = vand.u32 %v185, 2147483648
  %v234 = vsel %vm232, %v233, %v231
  %v235 = vrsqrt.pop %v186
  %v236 = vmul.f32 %v235, %v186
  %v237 = vmul.f32 %v236, %v235
  %v238 = vmul.f32 0.5, %v237
  %v239 = vsub.f32 1.5, %v238
  %v240 = vmul.f32 %v235, %v239
  %v241 = vmul.f32 %v186, %v240
  %vm242 = vcmp.eq.f32.partialorder %v186, inf
  %v243 = vsel %vm242, %v186, %v241
  %vm244 = vcmp.eq.f32.partialorder %v186, 0.0
  %v245 = vand.u32 %v186, 2147483648
  %v246 = vsel %vm244, %v245, %v243
  %v247 = vrsqrt.pop %v187
  %v248 = vmul.f32 %v247, %v187
  %v249 = vmul.f32 %v248, %v247
  %v250 = vmul.f32 0.5, %v249
  %v251 = vsub.f32 1.5, %v250
  %v252 = vmul.f32 %v247, %v251
  %v253 = vmul.f32 %v187, %v252
  %vm254 = vcmp.eq.f32.partialorder %v187, inf
  %v255 = vsel %vm254, %v187, %v253
  %vm256 = vcmp.eq.f32.partialorder %v187, 0.0
  %v257 = vand.u32 %v187, 2147483648
  %v258 = vsel %vm256, %v257, %v255
  %v259 = vrsqrt.pop %v188
  %v260 = vmul.f32 %v259, %v188
  %v261 = vmul.f32 %v260, %v259
  %v262 = vmul.f32 0.5, %v261
  %v263 = vsub.f32 1.5, %v262
  %v264 = vmul.f32 %v259, %v263
  %v265 = vmul.f32 %v188, %v264
  %vm266 = vcmp.eq.f32.partialorder %v188, inf
  %v267 = vsel %vm266, %v188, %v265
  %vm268 = vcmp.eq.f32.partialorder %v188, 0.0
  %v269 = vand.u32 %v188, 2147483648
  %v270 = vsel %vm268, %v269, %v267
  %v271 = vrsqrt.pop %v189
  %v272 = vmul.f32 %v271, %v189
  %v273 = vmul.f32 %v272, %v271
  %v274 = vmul.f32 0.5, %v273
  %v275 = vsub.f32 1.5, %v274
  %v276 = vmul.f32 %v271, %v275
  %v277 = vmul.f32 %v189, %v276
  %vm278 = vcmp.eq.f32.partialorder %v189, inf
  %v279 = vsel %vm278, %v189, %v277
  %vm280 = vcmp.eq.f32.partialorder %v189, 0.0
  %v281 = vand.u32 %v189, 2147483648
  %v282 = vsel %vm280, %v281, %v279
  %v283 = vrsqrt.pop %v190
  %v284 = vmul.f32 %v283, %v190
  %v285 = vmul.f32 %v284, %v283
  %v286 = vmul.f32 0.5, %v285
  %v287 = vsub.f32 1.5, %v286
  %v288 = vmul.f32 %v283, %v287
  %v289 = vmul.f32 %v190, %v288
  %vm290 = vcmp.eq.f32.partialorder %v190, inf
  %v291 = vsel %vm290, %v190, %v289
  %vm292 = vcmp.eq.f32.partialorder %v190, 0.0
  %v293 = vand.u32 %v190, 2147483648
  %v294 = vsel %vm292, %v293, %v291
  %v295 = vrsqrt.pop %v191
  %v296 = vmul.f32 %v295, %v191
  %v297 = vmul.f32 %v296, %v295
  %v298 = vmul.f32 0.5, %v297
  %v299 = vsub.f32 1.5, %v298
  %v300 = vmul.f32 %v295, %v299
  %v301 = vmul.f32 %v191, %v300
  %vm302 = vcmp.eq.f32.partialorder %v191, inf
  %v303 = vsel %vm302, %v191, %v301
  %vm304 = vcmp.eq.f32.partialorder %v191, 0.0
  %v305 = vand.u32 %v191, 2147483648
  %v306 = vsel %vm304, %v305, %v303
  %v307 = vrsqrt.pop %v192
  %v308 = vmul.f32 %v307, %v192
  %v309 = vmul.f32 %v308, %v307
  %v310 = vmul.f32 0.5, %v309
  %v311 = vsub.f32 1.5, %v310
  %v312 = vmul.f32 %v307, %v311
  %v313 = vmul.f32 %v192, %v312
  %vm314 = vcmp.eq.f32.partialorder %v192, inf
  %v315 = vsel %vm314, %v192, %v313
  %vm316 = vcmp.eq.f32.partialorder %v192, 0.0
  %v317 = vand.u32 %v192, 2147483648
  %v318 = vsel %vm316, %v317, %v315
  %v319 = vrsqrt.pop %v193
  %v320 = vmul.f32 %v319, %v193
  %v321 = vmul.f32 %v320, %v319
  %v322 = vmul.f32 0.5, %v321
  %v323 = vsub.f32 1.5, %v322
  %v324 = vmul.f32 %v319, %v323
  %v325 = vmul.f32 %v193, %v324
  %vm326 = vcmp.eq.f32.partialorder %v193, inf
  %v327 = vsel %vm326, %v193, %v325
  %vm328 = vcmp.eq.f32.partialorder %v193, 0.0
  %v329 = vand.u32 %v193, 2147483648
  %v330 = vsel %vm328, %v329, %v327
  %v331 = vrsqrt.pop %v194
  %v332 = vmul.f32 %v331, %v194
  %v333 = vmul.f32 %v332, %v331
  %v334 = vmul.f32 0.5, %v333
  %v335 = vsub.f32 1.5, %v334
  %v336 = vmul.f32 %v331, %v335
  %v337 = vmul.f32 %v194, %v336
  %vm338 = vcmp.eq.f32.partialorder %v194, inf
  %v339 = vsel %vm338, %v194, %v337
  %vm340 = vcmp.eq.f32.partialorder %v194, 0.0
  %v341 = vand.u32 %v194, 2147483648
  %v342 = vsel %vm340, %v341, %v339
  %v343 = vrsqrt.pop %v195
  %v344 = vmul.f32 %v343, %v195
  %v345 = vmul.f32 %v344, %v343
  %v346 = vmul.f32 0.5, %v345
  %v347 = vsub.f32 1.5, %v346
  %v348 = vmul.f32 %v343, %v347
  %v349 = vmul.f32 %v195, %v348
  %vm350 = vcmp.eq.f32.partialorder %v195, inf
  %v351 = vsel %vm350, %v195, %v349
  %vm352 = vcmp.eq.f32.partialorder %v195, 0.0
  %v353 = vand.u32 %v195, 2147483648
  %v354 = vsel %vm352, %v353, %v351
  %v355 = vrsqrt.pop %v196
  %v356 = vmul.f32 %v355, %v196
  %v357 = vmul.f32 %v356, %v355
  %v358 = vmul.f32 0.5, %v357
  %v359 = vsub.f32 1.5, %v358
  %v360 = vmul.f32 %v355, %v359
  %v361 = vmul.f32 %v196, %v360
  %vm362 = vcmp.eq.f32.partialorder %v196, inf
  %v363 = vsel %vm362, %v196, %v361
  %vm364 = vcmp.eq.f32.partialorder %v196, 0.0
  %v365 = vand.u32 %v196, 2147483648
  %v366 = vsel %vm364, %v365, %v363
  %v367 = vrsqrt.pop %v197
  %v368 = vmul.f32 %v367, %v197
  %v369 = vmul.f32 %v368, %v367
  %v370 = vmul.f32 0.5, %v369
  %v371 = vsub.f32 1.5, %v370
  %v372 = vmul.f32 %v367, %v371
  %v373 = vmul.f32 %v197, %v372
  %vm374 = vcmp.eq.f32.partialorder %v197, inf
  %v375 = vsel %vm374, %v197, %v373
  %vm376 = vcmp.eq.f32.partialorder %v197, 0.0
  %v377 = vand.u32 %v197, 2147483648
  %v378 = vsel %vm376, %v377, %v375
  %v379 = vrsqrt.pop %v198
  %v380 = vmul.f32 %v379, %v198
  %v381 = vmul.f32 %v380, %v379
  %v382 = vmul.f32 0.5, %v381
  %v383 = vsub.f32 1.5, %v382
  %v384 = vmul.f32 %v379, %v383
  %v385 = vmul.f32 %v198, %v384
  %vm386 = vcmp.eq.f32.partialorder %v198, inf
  %v387 = vsel %vm386, %v198, %v385
  %vm388 = vcmp.eq.f32.partialorder %v198, 0.0
  %v389 = vand.u32 %v198, 2147483648
  %v390 = vsel %vm388, %v389, %v387
  %vm391 = vcmask 7168
  %392 = vst.msk [vmem:[%s1] sm:$0xff] %vm391, %v210
  %393 = vst.msk [vmem:[%s1 + $0x8] sm:$0xff] %vm391, %v222
  %394 = vst.msk [vmem:[%s1 + $0x10] sm:$0xff] %vm391, %v234
  %395 = vst.msk [vmem:[%s1 + $0x18] sm:$0xff] %vm391, %v246
  %396 = vst.msk [vmem:[%s1 + $0x20] sm:$0xff] %vm391, %v258
  %397 = vst.msk [vmem:[%s1 + $0x28] sm:$0xff] %vm391, %v270
  %398 = vst.msk [vmem:[%s1 + $0x30] sm:$0xff] %vm391, %v282
  %399 = vst.msk [vmem:[%s1 + $0x38] sm:$0xff] %vm391, %v294
  %400 = vst.msk [vmem:[%s1 + $0x40] sm:$0xff] %vm391, %v306
  %401 = vst.msk [vmem:[%s1 + $0x48] sm:$0xff] %vm391, %v318
  %402 = vst.msk [vmem:[%s1 + $0x50] sm:$0xff] %vm391, %v330
  %403 = vst.msk [vmem:[%s1 + $0x58] sm:$0xff] %vm391, %v342
  %404 = vst.msk [vmem:[%s1 + $0x60] sm:$0xff] %vm391, %v354
  %405 = vst.msk [vmem:[%s1 + $0x68] sm:$0xff] %vm391, %v366
  %406 = vst.msk [vmem:[%s1 + $0x70] sm:$0xff] %vm391, %v378
  %407 = vst.msk [vmem:[%s1 + $0x78] sm:$0xff] %vm391, %v390
  // Predicated region
  $region6: #{tpu_custom_call.1} parent=0 // pred_check
    _
  $region7: #{tpu_custom_call.1} parent=0 // pred_check_branch
    %409 = sbr.rel (0) target = $region9
  $region8: #{tpu_custom_call.1} parent=0 // pred_region
    _
  $region9: #{tpu_custom_call.1} parent=0 // pred_fallthru
    _
  // Predicated region
  $region10: #{tpu_custom_call.1} parent=0 // pred_check
    _
  $region11: #{tpu_custom_call.1} parent=0 // pred_check_branch
    %411 = sbr.rel (0) target = $region13
  $region12: #{tpu_custom_call.1} parent=0 // pred_region
    _
  $region13: #{tpu_custom_call.1} parent=0 // pred_fallthru
    _

</llo_original>
